<compile_context>
chip_gen: v7x
topology: tpu7x:2x2x1
jax: 0.10.0
libtpu: 0.0.40
codegen_flags: <defaults>
</compile_context>

<pallas_src>
import functools

import jax
import jax.numpy as jnp
from jax import lax
from jax.experimental import pallas as pl
from jax.experimental.pallas import tpu as pltpu

EPS = 1e-5

_LANE_CHUNK = 128                  # one lane tile; VPU-add accumulation granule
_LANE_TILE_TARGET = 2048           # lane-axis tile target (two-sweep path)
_ROW_TILE_TARGET = 512             # row-axis tile target (two-sweep path)
_MAX_C_TILE = 64                   # fused path: channels per block cap (vregs)
_VMEM_BUDGET = 20 * 1024 * 1024    # pipeline working-set budget (fits v7x too)
_VMEM_LIMIT_BYTES = 48 * 1024 * 1024


def _cdiv(a, b):
    return -(-a // b)


def _round_up(a, m):
    return _cdiv(a, m) * m


def _row_quantum(dtype):
    # Minimum second-to-last block dim: 8 (4B), 16 (2B), 32 (1B dtypes).
    return 8 * (4 // dtype.itemsize)


def _compute_dtype(dtype):
    # bf16 fma on bf16 activations (v6e/v7x VPU is bf16-native); f32 otherwise.
    if dtype == jnp.bfloat16 or dtype == jnp.float32:
        return dtype
    return jnp.float32


# ============================= fused single pass =============================


def _fused_bnr_kernel(x_ref, g_ref, b_ref, o_ref, *, hw, count, eps, cdtype):
    """Stats + normalize + ReLU on one (N, c_tile, H*W) slab resident in VMEM."""
    _, c_tile, _ = x_ref.shape
    n_full = hw // _LANE_CHUNK
    rem = hw - n_full * _LANE_CHUNK
    inv_count = 1.0 / count

    # ---- per-channel sum / sum-of-squares, 128 lanes at a time (VPU adds) ----
    def stats_body(k, carry):
        s_acc, q_acc = carry
        off = pl.multiple_of(k * _LANE_CHUNK, _LANE_CHUNK)
        xc = x_ref[:, :, pl.ds(off, _LANE_CHUNK)].astype(jnp.float32)
        return s_acc + jnp.sum(xc, axis=0), q_acc + jnp.sum(xc * xc, axis=0)

    zeros = jnp.zeros((c_tile, _LANE_CHUNK), jnp.float32)
    s128, q128 = lax.fori_loop(0, n_full, stats_body, (zeros, zeros))
    s_c = jnp.sum(s128, axis=1, keepdims=True)            # (c_tile, 1)
    q_c = jnp.sum(q128, axis=1, keepdims=True)
    if rem:                                                # ragged spatial tail
        xt = x_ref[:, :, hw - rem:].astype(jnp.float32)
        s_c = s_c + jnp.sum(xt, axis=2, keepdims=True).sum(axis=0)
        q_c = q_c + jnp.sum(xt * xt, axis=2, keepdims=True).sum(axis=0)

    mean = s_c * inv_count
    var = jnp.maximum(q_c * inv_count - mean * mean, 0.0)  # biased variance
    inv_std = lax.rsqrt(var + eps)
    scale32 = g_ref[...] * inv_std                         # (c_tile, 1) f32
    shift32 = b_ref[...] - mean * scale32
    scale = scale32.astype(cdtype)
    shift = shift32.astype(cdtype)

    # ---- y = relu(x * scale + shift), streamed back out of the same slab ----
    def norm_chunk(off, width):
        xc = x_ref[:, :, pl.ds(off, width)].astype(cdtype)
        y = xc * scale[None] + shift[None]
        o_ref[:, :, pl.ds(off, width)] = jnp.maximum(y, 0).astype(o_ref.dtype)

    def norm_body(k, carry):
        off = pl.multiple_of(k * _LANE_CHUNK, _LANE_CHUNK)
        norm_chunk(off, _LANE_CHUNK)
        return carry

    lax.fori_loop(0, n_full, norm_body, 0)
    if rem:
        norm_chunk(hw - rem, rem)


def _bnr_fused(x, gamma, beta, eps):
    n, c, h, w = x.shape
    hw = h * w
    elem = x.dtype.itemsize
    q = _row_quantum(x.dtype)
    cdtype = _compute_dtype(x.dtype)

    if c <= q:
        c_tile = c                       # full channel dim is always a legal block dim
    else:
        per_c = n * hw * elem * 4        # 2 input + 2 output pipeline buffers
        c_tile = max(q, (min(_VMEM_BUDGET // per_c, _MAX_C_TILE) // q) * q)
        c_tile = min(c_tile, _round_up(c, q))
        # v7x megacore: prefer >= 2 "parallel" channel-grid steps when c allows it.
        if _cdiv(c, c_tile) < 2 and c >= 2 * q:
            c_tile = max(q, _round_up(_cdiv(c, 2), q))
    grid = (_cdiv(c, c_tile),)

    x3 = x.reshape(n, c, hw)             # free view (no transpose)
    g2 = gamma.astype(jnp.float32).reshape(c, 1)
    b2 = beta.astype(jnp.float32).reshape(c, 1)

    kernel = functools.partial(_fused_bnr_kernel, hw=hw, count=float(n * hw),
                               eps=float(eps), cdtype=cdtype)
    out3 = pl.pallas_call(
        kernel,
        out_shape=jax.ShapeDtypeStruct((n, c, hw), x.dtype),
        grid_spec=pltpu.PrefetchScalarGridSpec(
            num_scalar_prefetch=0,
            grid=grid,
            in_specs=[
                pl.BlockSpec((n, c_tile, hw), lambda j: (0, j, 0)),
                pl.BlockSpec((c_tile, 1), lambda j: (j, 0)),
                pl.BlockSpec((c_tile, 1), lambda j: (j, 0)),
            ],
            out_specs=pl.BlockSpec((n, c_tile, hw), lambda j: (0, j, 0)),
        ),
        compiler_params=pltpu.CompilerParams(
            dimension_semantics=("parallel",),
            vmem_limit_bytes=_VMEM_LIMIT_BYTES,
        ),
        cost_estimate=pl.CostEstimate(
            flops=6 * n * c * hw,
            transcendentals=c,
            bytes_accessed=2 * n * c * hw * elem,
        ),
    )(x3, g2, b2)
    return out3.reshape(n, c, h, w)


# ============================ two-sweep fallback =============================


def _stats_kernel(x_ref, sum_ref, sq_ref, *, hw, lane_tile, ragged):
    """Per-(n,c)-row partial sums with lane-wide (row, 128) accumulators."""
    j = pl.program_id(1)

    @pl.when(j == 0)
    def _():
        sum_ref[...] = jnp.zeros_like(sum_ref)
        sq_ref[...] = jnp.zeros_like(sq_ref)

    row_tile = x_ref.shape[0]
    nsub = lane_tile // _LANE_CHUNK

    def accum(mask_tail):
        s = jnp.zeros((row_tile, _LANE_CHUNK), jnp.float32)
        sq = jnp.zeros((row_tile, _LANE_CHUNK), jnp.float32)
        for k in range(nsub):                         # static unroll, <= 16 slices
            xs = x_ref[:, k * _LANE_CHUNK:(k + 1) * _LANE_CHUNK].astype(jnp.float32)
            if mask_tail:
                lane = (j * lane_tile + k * _LANE_CHUNK
                        + lax.broadcasted_iota(jnp.int32, (row_tile, _LANE_CHUNK), 1))
                xs = jnp.where(lane < hw, xs, 0.0)
            s = s + xs
            sq = sq + xs * xs
        sum_ref[...] += s
        sq_ref[...] += sq

    if not ragged:
        accum(False)
    else:
        last = pl.num_programs(1) - 1

        @pl.when(j != last)
        def _():
            accum(False)

        @pl.when(j == last)
        def _():
            accum(True)


def _norm_relu_kernel(x_ref, scale_ref, shift_ref, o_ref):
    cdtype = scale_ref.dtype
    y = x_ref[...].astype(cdtype) * scale_ref[...] + shift_ref[...]
    o_ref[...] = jnp.maximum(y, 0).astype(o_ref.dtype)


def _choose_lane_tile(hw, target=_LANE_TILE_TARGET):
    """Always a multiple of 128, never tiny, never an unbounded full-H*W block."""
    if hw <= target:
        return _round_up(hw, 128)
    t = (target // 128) * 128
    while t >= 512:                      # prefer a dividing tile, but never < 512
        if hw % t == 0:
            return t
        t -= 128
    return (target // 128) * 128         # non-dividing: cdiv grid + masked tail


def _choose_row_tile(r, q, lane_tile, elem):
    if r <= q:
        return r                         # full row dim (always legal)
    rt = min(_round_up(r, q), _ROW_TILE_TARGET)
    # v7x megacore: make sure the "parallel" row axis has >= 2 steps.
    if _cdiv(r, rt) < 2:
        rt = max(q, _round_up(_cdiv(r, 2), q))
    # Keep 2 input + 2 output pipeline buffers inside the VMEM budget.
    while rt > q and rt * lane_tile * max(elem, 4) * 4 > _VMEM_BUDGET:
        rt = max(q, _round_up(rt // 2, q))
    return rt


def _bnr_two_pass(x, gamma, beta, eps, lane_tile=None, row_tile=None):
    n, c, h, w = x.shape
    hw = h * w
    r = n * c
    elem = x.dtype.itemsize
    q = _row_quantum(x.dtype)
    cdtype = _compute_dtype(x.dtype)

    x2 = x.reshape(r, hw)                # free view: lane-dense (N*C, H*W)

    if lane_tile is None:
        lane_tile = _choose_lane_tile(hw)
    if row_tile is None:
        row_tile = _choose_row_tile(r, q, lane_tile, elem)
    ragged = (hw % lane_tile) != 0
    grid = (_cdiv(r, row_tile), _cdiv(hw, lane_tile))

    # ---- sweep 1: per-(n,c) partial sums, lane-wide (r, 128) accumulators ----
    stats = functools.partial(_stats_kernel, hw=hw, lane_tile=lane_tile, ragged=ragged)
    row_sum, row_sq = pl.pallas_call(
        stats,
        out_shape=(jax.ShapeDtypeStruct((r, 128), jnp.float32),
                   jax.ShapeDtypeStruct((r, 128), jnp.float32)),
        grid_spec=pltpu.PrefetchScalarGridSpec(
            num_scalar_prefetch=0,
            grid=grid,
            in_specs=[pl.BlockSpec((row_tile, lane_tile), lambda i, j: (i, j))],
            out_specs=(pl.BlockSpec((row_tile, 128), lambda i, j: (i, 0)),
                       pl.BlockSpec((row_tile, 128), lambda i, j: (i, 0))),
        ),
        compiler_params=pltpu.CompilerParams(
            dimension_semantics=("parallel", "arbitrary"),
            vmem_limit_bytes=_VMEM_LIMIT_BYTES,
        ),
        cost_estimate=pl.CostEstimate(
            flops=3 * r * hw, transcendentals=0,
            bytes_accessed=r * hw * elem + 2 * r * 128 * 4),
    )(x2)

    # ---- combine: per-channel scale/shift (tiny, plain JAX) ----
    count = jnp.float32(n * hw)
    ch_sum = row_sum.reshape(n, c, 128).sum(axis=(0, 2))
    ch_sq = row_sq.reshape(n, c, 128).sum(axis=(0, 2))
    mean = ch_sum / count
    var = jnp.maximum(ch_sq / count - mean * mean, 0.0)     # biased variance
    inv_std = lax.rsqrt(var + eps)
    scale_c = gamma.astype(jnp.float32) * inv_std
    shift_c = beta.astype(jnp.float32) - mean * scale_c
    scale_r = jnp.broadcast_to(scale_c[None, :], (n, c)).reshape(r, 1).astype(cdtype)
    shift_r = jnp.broadcast_to(shift_c[None, :], (n, c)).reshape(r, 1).astype(cdtype)

    # ---- sweep 2: y = relu(x * scale + shift), lane-dense output tiles ----
    out2 = pl.pallas_call(
        _norm_relu_kernel,
        out_shape=jax.ShapeDtypeStruct((r, hw), x.dtype),
        grid_spec=pltpu.PrefetchScalarGridSpec(
            num_scalar_prefetch=0,
            grid=grid,
            in_specs=[
                pl.BlockSpec((row_tile, lane_tile), lambda i, j: (i, j)),
                pl.BlockSpec((row_tile, 1), lambda i, j: (i, 0)),
                pl.BlockSpec((row_tile, 1), lambda i, j: (i, 0)),
            ],
            out_specs=pl.BlockSpec((row_tile, lane_tile), lambda i, j: (i, j)),
        ),
        compiler_params=pltpu.CompilerParams(
            dimension_semantics=("parallel", "parallel"),
            vmem_limit_bytes=_VMEM_LIMIT_BYTES,
        ),
        cost_estimate=pl.CostEstimate(
            flops=3 * r * hw, transcendentals=0,
            bytes_accessed=2 * r * hw * elem + 4 * r * elem),
    )(x2, scale_r, shift_r)
    return out2.reshape(n, c, h, w)


# ================================ public API =================================


def batch_norm_relu(x, gamma, beta, eps=EPS, *, force_two_pass=False,
                    lane_tile=None, row_tile=None):
    """BatchNorm2d (training-mode batch statistics) + ReLU.  x: (N, C, H, W)."""
    n, c, h, w = x.shape
    hw = h * w
    elem = x.dtype.itemsize
    q = _row_quantum(x.dtype)
    c_min = c if c <= q else q
    fused_bytes = n * c_min * hw * elem * 4      # 2 in + 2 out pipeline buffers
    if (not force_two_pass) and fused_bytes <= _VMEM_BUDGET:
        # Single HBM read + single HBM write (drops the extra stats pass).
        return _bnr_fused(x, gamma, beta, eps)
    return _bnr_two_pass(x, gamma, beta, eps, lane_tile=lane_tile, row_tile=row_tile)


if __name__ == "__main__":
    key = jax.random.PRNGKey(0)
    k_x, k_g, k_b = jax.random.split(key, 3)

    def reference(x, g, b, eps=EPS):
        xf = x.astype(jnp.float32)
        mean = jnp.mean(xf, axis=(0, 2, 3), keepdims=True)
        var = jnp.mean((xf - mean) ** 2, axis=(0, 2, 3), keepdims=True)
        y = (xf - mean) * lax.rsqrt(var + eps)
        y = y * g.reshape(1, -1, 1, 1) + b.reshape(1, -1, 1, 1)
        return jnp.maximum(y, 0.0)

    N, C = 2, 4
    gamma = jnp.ones((C,), jnp.float32) + 0.1 * jax.random.normal(k_g, (C,), jnp.float32)
    beta = 0.1 * jax.random.normal(k_b, (C,), jnp.float32)

    # 1) fused single-pass path (f32, 2x4x16x16)
    x1 = jax.random.normal(k_x, (N, C, 16, 16), dtype=jnp.float32)
    out1 = jax.block_until_ready(batch_norm_relu(x1, gamma, beta))
    assert out1.shape == x1.shape and out1.dtype == x1.dtype
    assert jnp.allclose(out1, reference(x1, gamma, beta), atol=1e-4, rtol=1e-4)

    # 2) two-sweep path, evenly dividing lane tiles (f32)
    out2 = jax.block_until_ready(batch_norm_relu(x1, gamma, beta, force_two_pass=True))
    assert jnp.allclose(out2, reference(x1, gamma, beta), atol=1e-4, rtol=1e-4)

    # 3) two-sweep path, ragged (masked) lane tail: H*W = 169 with lane_tile = 128
    x3 = jax.random.normal(k_x, (N, C, 13, 13), dtype=jnp.float32)
    out3 = jax.block_until_ready(
        batch_norm_relu(x3, gamma, beta, force_two_pass=True, lane_tile=128))
    assert jnp.allclose(out3, reference(x3, gamma, beta), atol=1e-4, rtol=1e-4)

    # 4) fused path with bf16 activations (bf16 fma in the normalize step)
    x4 = x1.astype(jnp.bfloat16)
    out4 = jax.block_until_ready(batch_norm_relu(x4, gamma, beta))
    assert out4.dtype == jnp.bfloat16
    assert jnp.allclose(out4.astype(jnp.float32), reference(x4, gamma, beta),
                        atol=5e-2, rtol=5e-2)

    print("KERNEL_OK")
</pallas_src>

<mosaic_0001>
module attributes {stable_mosaic.version = 11 : i64} {
  func.func @_fused_bnr_kernel(%arg0: i32, %arg1: memref<2x4x256xf32, #tpu.memory_space<vmem>>, %arg2: memref<4x1xf32, #tpu.memory_space<vmem>>, %arg3: memref<4x1xf32, #tpu.memory_space<vmem>>, %arg4: memref<2x4x256xf32, #tpu.memory_space<vmem>>) attributes {dimension_semantics = [#tpu.dimension_semantics<parallel>], iteration_bounds = array<i64: 1>, scalar_prefetch = 0 : i64, scratch_operands = 0 : i64, tpu.core_type = #tpu.core_type<tc>, window_params = [{transform_indices = @transform_0, window_bounds = array<i64: 2, 4, 256>}, {transform_indices = @transform_1, window_bounds = array<i64: 4, 1>}, {transform_indices = @transform_2, window_bounds = array<i64: 4, 1>}, {transform_indices = @transform_3, window_bounds = array<i64: 2, 4, 256>}]} {
    %cst = arith.constant 0.000000e+00 : f32
    %0 = vector.broadcast %cst : f32 to vector<4x128xf32>
    %c0_i32 = arith.constant 0 : i32
    %c2_i32 = arith.constant 2 : i32
    %1 = arith.addi %c0_i32, %c2_i32 : i32
    %c1_i32 = arith.constant 1 : i32
    %2:2 = scf.for %arg5 = %c0_i32 to %1 step %c1_i32 iter_args(%arg6 = %0, %arg7 = %0) -> (vector<4x128xf32>, vector<4x128xf32>)  : i32 {
      %c128_i32 = arith.constant 128 : i32
      %24 = arith.muli %arg5, %c128_i32 : i32
      %25 = tpu.assume_multiple %24, 128 : i32
      %c0_14 = arith.constant 0 : index
      %c0_15 = arith.constant 0 : index
      %26 = arith.index_cast %25 : i32 to index
      %27 = vector.load %arg1[%c0_14, %c0_15, %26] : memref<2x4x256xf32, #tpu.memory_space<vmem>>, vector<2x4x128xf32>
      %cst_16 = arith.constant dense<0.000000e+00> : vector<4x128xf32>
      %28 = vector.multi_reduction <add>, %27, %cst_16 [0] : vector<2x4x128xf32> to vector<4x128xf32>
      %29 = arith.addf %arg6, %28 : vector<4x128xf32>
      %30 = arith.mulf %27, %27 : vector<2x4x128xf32>
      %cst_17 = arith.constant dense<0.000000e+00> : vector<4x128xf32>
      %31 = vector.multi_reduction <add>, %30, %cst_17 [0] : vector<2x4x128xf32> to vector<4x128xf32>
      %32 = arith.addf %arg7, %31 : vector<4x128xf32>
      scf.yield %29, %32 : vector<4x128xf32>, vector<4x128xf32>
    }
    %c2_i32_0 = arith.constant 2 : i32
    %cst_1 = arith.constant dense<0.000000e+00> : vector<4xf32>
    %3 = vector.multi_reduction <add>, %2#0, %cst_1 [1] : vector<4x128xf32> to vector<4xf32>
    %4 = vector.shape_cast %3 : vector<4xf32> to vector<4x1xf32>
    %cst_2 = arith.constant dense<0.000000e+00> : vector<4xf32>
    %5 = vector.multi_reduction <add>, %2#1, %cst_2 [1] : vector<4x128xf32> to vector<4xf32>
    %6 = vector.shape_cast %5 : vector<4xf32> to vector<4x1xf32>
    %cst_3 = arith.constant 0.001953125 : f32
    %7 = vector.broadcast %cst_3 : f32 to vector<4x1xf32>
    %8 = arith.mulf %4, %7 : vector<4x1xf32>
    %cst_4 = arith.constant 0.001953125 : f32
    %9 = vector.broadcast %cst_4 : f32 to vector<4x1xf32>
    %10 = arith.mulf %6, %9 : vector<4x1xf32>
    %11 = arith.mulf %8, %8 : vector<4x1xf32>
    %12 = arith.subf %10, %11 : vector<4x1xf32>
    %cst_5 = arith.constant 0.000000e+00 : f32
    %13 = vector.broadcast %cst_5 : f32 to vector<4x1xf32>
    %14 = arith.maximumf %12, %13 : vector<4x1xf32>
    %cst_6 = arith.constant 9.99999974E-6 : f32
    %15 = vector.broadcast %cst_6 : f32 to vector<4x1xf32>
    %16 = arith.addf %14, %15 : vector<4x1xf32>
    %17 = math.rsqrt %16 : vector<4x1xf32>
    %c0 = arith.constant 0 : index
    %c0_7 = arith.constant 0 : index
    %18 = vector.load %arg2[%c0, %c0_7] : memref<4x1xf32, #tpu.memory_space<vmem>>, vector<4x1xf32>
    %19 = arith.mulf %18, %17 : vector<4x1xf32>
    %c0_8 = arith.constant 0 : index
    %c0_9 = arith.constant 0 : index
    %20 = vector.load %arg3[%c0_8, %c0_9] : memref<4x1xf32, #tpu.memory_space<vmem>>, vector<4x1xf32>
    %21 = arith.mulf %8, %19 : vector<4x1xf32>
    %22 = arith.subf %20, %21 : vector<4x1xf32>
    %c0_i32_10 = arith.constant 0 : i32
    %c2_i32_11 = arith.constant 2 : i32
    %23 = arith.addi %c0_i32_10, %c2_i32_11 : i32
    %c1_i32_12 = arith.constant 1 : i32
    scf.for %arg5 = %c0_i32_10 to %23 step %c1_i32_12  : i32 {
      %c128_i32 = arith.constant 128 : i32
      %24 = arith.muli %arg5, %c128_i32 : i32
      %25 = tpu.assume_multiple %24, 128 : i32
      %c0_14 = arith.constant 0 : index
      %c0_15 = arith.constant 0 : index
      %26 = arith.index_cast %25 : i32 to index
      %27 = vector.load %arg1[%c0_14, %c0_15, %26] : memref<2x4x256xf32, #tpu.memory_space<vmem>>, vector<2x4x128xf32>
      %28 = vector.shape_cast %19 : vector<4x1xf32> to vector<1x4x1xf32>
      %29 = vector.broadcast %28 : vector<1x4x1xf32> to vector<2x4x128xf32>
      %30 = arith.mulf %27, %29 : vector<2x4x128xf32>
      %31 = vector.shape_cast %22 : vector<4x1xf32> to vector<1x4x1xf32>
      %32 = vector.broadcast %31 : vector<1x4x1xf32> to vector<2x4x128xf32>
      %33 = arith.addf %30, %32 : vector<2x4x128xf32>
      %cst_16 = arith.constant 0.000000e+00 : f32
      %34 = vector.broadcast %cst_16 : f32 to vector<2x4x128xf32>
      %35 = arith.maximumf %33, %34 : vector<2x4x128xf32>
      %c0_17 = arith.constant 0 : index
      %c0_18 = arith.constant 0 : index
      %36 = arith.index_cast %25 : i32 to index
      %37 = vector.load %arg4[%c0_17, %c0_18, %36] : memref<2x4x256xf32, #tpu.memory_space<vmem>>, vector<2x4x128xf32>
      tpu.vector_store %arg4[%c0_17, %c0_18, %36], %35 {strides = array<i32>} : memref<2x4x256xf32, #tpu.memory_space<vmem>>, vector<2x4x128xf32>,
    }
    %c2_i32_13 = arith.constant 2 : i32
    return
  }
  func.func @transform_0(%arg0: i32) -> (i32, i32, i32) {
    %c0_i32 = arith.constant 0 : i32
    %c0_i32_0 = arith.constant 0 : i32
    %c0_i32_1 = arith.constant 0 : i32
    return %c0_i32, %arg0, %c0_i32_0 : i32, i32, i32
  }
  func.func @transform_1(%arg0: i32) -> (i32, i32) {
    %c0_i32 = arith.constant 0 : i32
    %c0_i32_0 = arith.constant 0 : i32
    return %arg0, %c0_i32 : i32, i32
  }
  func.func @transform_2(%arg0: i32) -> (i32, i32) {
    %c0_i32 = arith.constant 0 : i32
    %c0_i32_0 = arith.constant 0 : i32
    return %arg0, %c0_i32 : i32, i32
  }
  func.func @transform_3(%arg0: i32) -> (i32, i32, i32) {
    %c0_i32 = arith.constant 0 : i32
    %c0_i32_0 = arith.constant 0 : i32
    %c0_i32_1 = arith.constant 0 : i32
    return %c0_i32, %arg0, %c0_i32_0 : i32, i32, i32
  }
}

</mosaic_0001>

<llo_original>
// kernel: tpu_custom_call.1
$region0: #{tpu_custom_call.1}
  #allocation0 [shape = 'u32[]', space=smem, size = 0x4, offset = 0x4, fixed_abs, tag = 'smem constant byte address 0x4 - core index']
  #allocation1 [shape = 'u32[144,128]{1,0:T(1,128)}', space=vmem, size = 0x12000, scoped, tag = 'internal scratch']
  %s0 = inlined_call_operand.hbm [shape: f32[2,4,256], index: 0, kind: input, shape index: {}]
  %s1 = inlined_call_operand.vmem [shape: f32[4,1], index: 1, kind: input, shape index: {}]
  %s2 = inlined_call_operand.vmem [shape: f32[4,1], index: 2, kind: input, shape index: {}]
  %s3 = inlined_call_operand.hbm [shape: f32[2,4,256], index: 3, kind: output, shape index: {}]
  %s4 = sld [smem:[#allocation0]]
  $region40: #{tpu_custom_call.1} parent=0
    _
  %s6 = ssub.s32 1, %s4
  %s7 = scalar_select 0, %s6, %s4
  $region1: #{tpu_custom_call.1} parent=0
    #allocation2 [shape = 'u8[8192]{0}', space=vmem, size = 0x2000, scoped, tag = 'input window, operand 0, single buffered']
    #allocation3 [shape = 's32[1]{0}', space=sflag, size = 0x4, scoped, tag = 'scoped memory for tpu_custom_call.1']
    #allocation4 [shape = 's32[1]{0}', space=sflag, size = 0x4, scoped, tag = 'scoped memory for tpu_custom_call.1']
    #allocation5 [shape = 'u8[8192]{0}', space=vmem, size = 0x2000, scoped, tag = 'output window, operand 0, single buffered']
    %8 = vsyncpa [#allocation3], 0
    %9 = vsyncpa [#allocation4], 0
    // Predicated region
    $region2: #{tpu_custom_call.1} parent=1 // pred_check
      _
    $region3: #{tpu_custom_call.1} parent=1 // pred_check_branch
      %11 = sbr.rel (0) target = $region5
    $region4: #{tpu_custom_call.1} parent=1 // pred_region
      %s13 = ssub.s32 256, 256
      %14 = vsyncadd [#allocation3], %s13
      %s15 = sshll.u32 [#allocation2], 4
      %s16 = int_to_ptr.vmem [resolvable:$true] %s15
      %21 = dma.hbm_to_vmem [thread:$0]  %s0, 256, %s16, [#allocation3], 128, 128, 8
    $region5: #{tpu_custom_call.1} parent=1 // pred_fallthru
      _
    // Predicated region
    $region6: #{tpu_custom_call.1} parent=1 // pred_check
      _
    $region7: #{tpu_custom_call.1} parent=1 // pred_check_branch
      %23 = sbr.rel (0) target = $region9
    $region8: #{tpu_custom_call.1} parent=1 // pred_region
      _
    $region9: #{tpu_custom_call.1} parent=1 // pred_fallthru
      _
    // Predicated region
    $region10: #{tpu_custom_call.1} parent=1 // pred_check
      _
    $region11: #{tpu_custom_call.1} parent=1 // pred_check_branch
      %25 = sbr.rel (0) target = $region13
    $region12: #{tpu_custom_call.1} parent=1 // pred_region
      _
    $region13: #{tpu_custom_call.1} parent=1 // pred_fallthru
      _
    // Predicated region
    $region14: #{tpu_custom_call.1} parent=1 // pred_check
      _
    $region15: #{tpu_custom_call.1} parent=1 // pred_check_branch
      %27 = sbr.rel (0) target = $region17
    $region16: #{tpu_custom_call.1} parent=1 // pred_region
      %28 = dma.done [#allocation3], 256
    $region17: #{tpu_custom_call.1} parent=1 // pred_fallthru
      _
    loop: start=0, step=1, limit=2
    $region18: #{tpu_custom_call.1} parent=1 // loop_pre_header
      _
    $region19: #{tpu_custom_call.1} parent=1 // loop_header
      %s30 = sphi 0, %s34
      %p31 = scmp.ge.s32.totalorder %s30, 2
      %v35 = vphi 0.0, %v48
      %v36 = vphi 0.0, %v54
    $region20: #{tpu_custom_call.1} parent=1 // loop_header_branch
      %33 = sbr.rel (%p31) target = $region24
    $region21: #{tpu_custom_call.1} parent=1 // loop_body
      %s37 = smul.u32 %s30, 128
      %s38 = sshra.s32 %s37, 7
      %s39 = sand.u32 %s37, 127
      %s40 = smul.addr %s38, 4
      %s41 = scalar_lea.vmem [#allocation2], %s40
      %v42 = vld [vmem:[%s41] sm:$0xf]
      %v43 = vld [vmem:[%s41 + $0x8] sm:$0xf]
      %vm44 = vcmask 1043456
      %v45 = vsel %vm44, %v42, 0.0
      %v46 = vsel %vm44, %v43, 0.0
      %v47 = vadd.f32 %v45, %v46
      %v48 = vadd.f32 %v35, %v47
      %v49 = vmul.f32 %v42, %v42
      %v50 = vmul.f32 %v43, %v43
      %v51 = vsel %vm44, %v49, 0.0
      %v52 = vsel %vm44, %v50, 0.0
      %v53 = vadd.f32 %v51, %v52
      %v54 = vadd.f32 %v36, %v53
    $region22: #{tpu_custom_call.1} parent=1 // loop_footer
      %s34 = sadd.s32 1, %s30
    $region23: #{tpu_custom_call.1} parent=1 // loop_footer_branch
      %29 = sbr.rel target = $region19
    $region24: #{tpu_custom_call.1} parent=1 // loop_exit
      _
    %vm55 = vcmask 1043456
    %v56 = vsel %vm55, %v35, 0.0
    %57 = vadd.xlane.f32.xlu0 %v56
    %v58 = vpop.xlane.xlu0 %57
    %v59 = vsel %vm55, %v36, 0.0
    %60 = vadd.xlane.f32.xlu0 %v59
    %v61 = vpop.xlane.xlu0 %60
    %v62 = vmul.f32 %v58, 0.001953125
    %v63 = vmul.f32 %v61, 0.001953125
    %v64 = vmul.f32 %v62, %v62
    %v65 = vsub.f32 %v63, %v64
    %v66 = vmax.f32 %v65, 0.0
    %v67 = vadd.f32 %v66, 1e-05
    %v68 = vrsqrt.pop %v67
    %v69 = vld [vmem:[%s1] sm:$0xf]
    %v70 = vmul.f32 %v69, %v68
    %v71 = vld [vmem:[%s2] sm:$0xf]
    %v72 = vmul.f32 %v62, %v70
    %v73 = vsub.f32 %v71, %v72
    loop: start=0, step=1, limit=2
    $region25: #{tpu_custom_call.1} parent=1 // loop_pre_header
      _
    $region26: #{tpu_custom_call.1} parent=1 // loop_header
      %s75 = sphi 0, %s79
      %p76 = scmp.ge.s32.totalorder %s75, 2
    $region27: #{tpu_custom_call.1} parent=1 // loop_header_branch
      %78 = sbr.rel (%p76) target = $region31
    $region28: #{tpu_custom_call.1} parent=1 // loop_body
      %s80 = smul.u32 %s75, 128
      %s81 = sshra.s32 %s80, 7
      %s82 = sand.u32 %s80, 127
      %s83 = smul.addr %s81, 4
      %s84 = scalar_lea.vmem [#allocation2], %s83
      %v85 = vld [vmem:[%s84] sm:$0xf]
      %v86 = vld [vmem:[%s84 + $0x8] sm:$0xf]
      %88 = vset.pattern.permute.xlu0 0
      %89 = vperm.xlu0 %88, %v70
      %v90 = vpop.permute.xlu0 %89
      %v92 = vmul.f32 %v85, %v90
      %v93 = vmul.f32 %v86, %v90
      %95 = vset.pattern.permute.xlu0 0
      %96 = vperm.xlu0 %95, %v73
      %v97 = vpop.permute.xlu0 %96
      %v99 = vadd.f32 %v92, %v97
      %v100 = vadd.f32 %v93, %v97
      %v101 = vmax.f32 %v99, 0.0
      %v102 = vmax.f32 %v100, 0.0
      %s103 = smul.addr %s81, 4
      %s104 = scalar_lea.vmem [#allocation5], %s103
      %105 = vst [vmem:[%s104] sm:$0xf] %v101
      %106 = vst [vmem:[%s104 + $0x8] sm:$0xf] %v102
    $region29: #{tpu_custom_call.1} parent=1 // loop_footer
      %s79 = sadd.s32 1, %s75
    $region30: #{tpu_custom_call.1} parent=1 // loop_footer_branch
      %74 = sbr.rel target = $region26
    $region31: #{tpu_custom_call.1} parent=1 // loop_exit
      _
    // Predicated region
    $region32: #{tpu_custom_call.1} parent=1 // pred_check
      _
    $region33: #{tpu_custom_call.1} parent=1 // pred_check_branch
      %108 = sbr.rel (0) target = $region35
    $region34: #{tpu_custom_call.1} parent=1 // pred_region
      %s110 = ssub.s32 256, 256
      %111 = vsyncadd [#allocation4], %s110
      %s112 = sshll.u32 [#allocation5], 4
      %s113 = int_to_ptr.vmem [resolvable:$true] %s112
      %118 = dma.vmem_to_hbm [thread:$0]  %s113, 256, %s3, [#allocation4], 128, 128, 8
    $region35: #{tpu_custom_call.1} parent=1 // pred_fallthru
      _
    // Predicated region
    $region36: #{tpu_custom_call.1} parent=1 // pred_check
      _
    $region37: #{tpu_custom_call.1} parent=1 // pred_check_branch
      %120 = sbr.rel (0) target = $region39
    $region38: #{tpu_custom_call.1} parent=1 // pred_region
      %121 = dma.done [#allocation4], 256
    $region39: #{tpu_custom_call.1} parent=1 // pred_fallthru
      _
    %122 = vsyncpa [#allocation3], 1
    %123 = vsyncpa [#allocation4], 1

</llo_original>
